<compile_context>
chip_gen: v7x
topology: tpu7x:2x2x1
jax: 0.10.0
libtpu: 0.0.40
codegen_flags: <defaults>
</compile_context>

<pallas_src>
import functools

import jax
import jax.numpy as jnp
from jax import lax
from jax.experimental import pallas as pl
from jax.experimental.pallas import tpu as pltpu

_LN_EPS = 1e-5   # torch.nn.LayerNorm default


# ---------------------------------------------------------------------------
# Kernel 1: pos_embed = depthwise 3x3 conv (padding=1, groups=C) + residual.
# One grid step per batch element; the channel loop runs inside the kernel so
# the whole (C, H+2, W+2) slab is one large DMA (no tiny per-channel grid
# steps).  The 9 tap weights and the bias live in SMEM, read as scalars.
# ---------------------------------------------------------------------------
def _pos_embed_kernel(xp_ref, w_ref, b_ref, o_ref):
    # xp_ref: (C, H+2, W+2)  zero-padded input plane for this batch element
    # w_ref : (C*9,)  SMEM   depthwise taps, row-major over (dy, dx)
    # b_ref : (C,)    SMEM   conv bias
    # o_ref : (C, H, W)      x + conv(x)
    n_ch, H, W = o_ref.shape

    def body(c, carry):
        xc = xp_ref[c]                                        # (H+2, W+2)
        # residual (centre of the padded plane) + conv bias
        acc = xc[1:1 + H, 1:1 + W].astype(jnp.float32) + b_ref[c]
        for k in range(9):                                    # static 3x3 taps
            dy, dx = k // 3, k % 3
            acc = acc + xc[dy:dy + H, dx:dx + W].astype(jnp.float32) * w_ref[c * 9 + k]
        o_ref[c] = acc.astype(o_ref.dtype)
        return carry

    lax.fori_loop(0, n_ch, body, 0)


# ---------------------------------------------------------------------------
# Kernel 2: fused LN1 -> MHA -> layer-scale residual -> LN2 -> MLP -> residual
# on a (C, S) slab (channels on sublanes, tokens on lanes).
# ---------------------------------------------------------------------------
def _ln_over_channels(z, w, b):
    # LayerNorm over the channel (sublane) axis of a (C, S) slab.
    mu = jnp.mean(z, axis=0, keepdims=True)                   # (1, S)
    zc = z - mu
    var = jnp.mean(zc * zc, axis=0, keepdims=True)            # (1, S)
    return zc * lax.rsqrt(var + _LN_EPS) * w + b              # (C,S)*(1,S)*(C,1)+(C,1)


def _sablock_core_kernel(x_ref, ln1w_ref, ln1b_ref, wqkv_ref, wproj_ref,
                         bproj_ref, g1_ref, ln2w_ref, ln2b_ref, w1_ref,
                         b1_ref, w2_ref, b2_ref, g2_ref, o_ref,
                         *, num_heads, scale):
    f32 = jnp.float32
    x = x_ref[...].astype(f32)                                # (C, S)
    C, S = x.shape
    hd = C // num_heads

    # -------- attention branch: x += gamma_1 * Attn(LN1(x)) -----------------
    xn = _ln_over_channels(x, ln1w_ref[...].astype(f32), ln1b_ref[...].astype(f32))
    # qkv (qkv_bias=False): rows 0..C-1 = q, C..2C-1 = k, 2C..3C-1 = v
    # (head-major inside each third, matching torch's reshape/permute).
    # NOTE(perf): for bf16 inputs feed bf16 operands straight to the dots; the
    # MXU accumulates in f32 via preferred_element_type (test data is f32).
    qkv = jnp.dot(wqkv_ref[...].astype(f32), xn, preferred_element_type=f32)  # (3C, S)

    head_outs = []
    for h in range(num_heads):                                # static, small
        q = qkv[h * hd:(h + 1) * hd, :]                       # (hd, S)
        k = qkv[C + h * hd:C + (h + 1) * hd, :]               # (hd, S)
        v = qkv[2 * C + h * hd:2 * C + (h + 1) * hd, :]       # (hd, S)
        # scores[i, j] = sum_d q[d, i] * k[d, j]
        s = jnp.dot(q.T, k, preferred_element_type=f32) * scale       # (S, S)
        s = s - jnp.max(s, axis=-1, keepdims=True)
        p = jnp.exp(s)
        p = p / jnp.sum(p, axis=-1, keepdims=True)            # exact softmax
        # out[d, i] = sum_j v[d, j] * p[i, j]
        head_outs.append(jnp.einsum("dj,ij->di", v, p, preferred_element_type=f32))
    attn = jnp.concatenate(head_outs, axis=0)                 # (C, S)
    attn = jnp.dot(wproj_ref[...].astype(f32), attn, preferred_element_type=f32)
    attn = attn + bproj_ref[...].astype(f32)                  # (C,S) + (C,1)
    x = x + g1_ref[...].astype(f32) * attn

    # -------- MLP branch: x += gamma_2 * Mlp(LN2(x)) -------------------------
    xn2 = _ln_over_channels(x, ln2w_ref[...].astype(f32), ln2b_ref[...].astype(f32))
    h1 = jnp.dot(w1_ref[...].astype(f32), xn2, preferred_element_type=f32)
    h1 = jax.nn.gelu(h1 + b1_ref[...].astype(f32), approximate=False)  # torch GELU (erf)
    m = jnp.dot(w2_ref[...].astype(f32), h1, preferred_element_type=f32)
    m = m + b2_ref[...].astype(f32)
    x = x + g2_ref[...].astype(f32) * m

    o_ref[...] = x.astype(o_ref.dtype)


# ---------------------------------------------------------------------------
# Wrapper
# ---------------------------------------------------------------------------
def sablock_pallas(x, params, num_heads):
    B, C, H, W = x.shape
    S = H * W
    hidden = params["w_fc1"].shape[0]
    hd = C // num_heads
    scale = float(hd) ** -0.5

    # ---- pos_embed (depthwise conv + residual) ------------------------------
    xp = jnp.pad(x, ((0, 0), (0, 0), (1, 1), (1, 1)))         # conv halo only
    smem_spec = pl.BlockSpec(memory_space=pltpu.MemorySpace.SMEM)
    y = pl.pallas_call(
        _pos_embed_kernel,
        out_shape=jax.ShapeDtypeStruct((B, C, H, W), x.dtype),
        grid_spec=pltpu.PrefetchScalarGridSpec(
            num_scalar_prefetch=0,
            grid=(B,),
            in_specs=[
                pl.BlockSpec((None, C, H + 2, W + 2), lambda b: (b, 0, 0, 0)),
                smem_spec,                                    # taps   (C*9,)
                smem_spec,                                    # bias   (C,)
            ],
            out_specs=pl.BlockSpec((None, C, H, W), lambda b: (b, 0, 0, 0)),
        ),
        compiler_params=pltpu.CompilerParams(dimension_semantics=("parallel",)),
    )(xp, params["w_dw"].reshape(C * 9), params["b_dw"])

    # ---- fused LN1 -> attention -> LN2 -> MLP (one batch element per step) ---
    x_bcs = y.reshape(B, C, S)                                # free NCHW flatten
    col = lambda v: v.reshape(v.shape[0], 1)                  # (n,) -> (n,1): lane bcast
    full = lambda r, c: pl.BlockSpec((r, c), lambda b: (0, 0))  # resident params

    kernel = functools.partial(_sablock_core_kernel, num_heads=num_heads, scale=scale)
    out = pl.pallas_call(
        kernel,
        out_shape=jax.ShapeDtypeStruct((B, C, S), x.dtype),
        grid_spec=pltpu.PrefetchScalarGridSpec(
            num_scalar_prefetch=0,
            grid=(B,),
            in_specs=[
                pl.BlockSpec((None, C, S), lambda b: (b, 0, 0)),   # tokens (C,S)
                full(C, 1), full(C, 1),                            # LN1 w, b
                full(3 * C, C),                                    # W_qkv
                full(C, C), full(C, 1),                            # W_proj, b_proj
                full(C, 1),                                        # gamma_1
                full(C, 1), full(C, 1),                            # LN2 w, b
                full(hidden, C), full(hidden, 1),                  # W_fc1, b_fc1
                full(C, hidden), full(C, 1),                       # W_fc2, b_fc2
                full(C, 1),                                        # gamma_2
            ],
            out_specs=pl.BlockSpec((None, C, S), lambda b: (b, 0, 0)),
        ),
        compiler_params=pltpu.CompilerParams(dimension_semantics=("parallel",)),
    )(
        x_bcs,
        col(params["ln1_w"]), col(params["ln1_b"]),
        params["w_qkv"],
        params["w_proj"], col(params["b_proj"]),
        col(params["gamma_1"]),
        col(params["ln2_w"]), col(params["ln2_b"]),
        params["w_fc1"], col(params["b_fc1"]),
        params["w_fc2"], col(params["b_fc2"]),
        col(params["gamma_2"]),
    )
    return out.reshape(B, C, H, W)


# ---------------------------------------------------------------------------
# Pure-JAX reference of the PyTorch SABlock.forward (for verification)
# ---------------------------------------------------------------------------
def sablock_reference(x, params, num_heads):
    B, C, H, W = x.shape
    conv = lax.conv_general_dilated(
        x, params["w_dw"].reshape(C, 1, 3, 3),
        window_strides=(1, 1), padding=((1, 1), (1, 1)),
        dimension_numbers=("NCHW", "OIHW", "NCHW"),
        feature_group_count=C)
    x = x + conv + params["b_dw"][None, :, None, None]

    S = H * W
    t = x.reshape(B, C, S).transpose(0, 2, 1)                 # (B, S, C)

    def ln(z, w, b):
        mu = jnp.mean(z, axis=-1, keepdims=True)
        var = jnp.mean((z - mu) ** 2, axis=-1, keepdims=True)
        return (z - mu) * lax.rsqrt(var + _LN_EPS) * w + b

    hd = C // num_heads
    scale = float(hd) ** -0.5
    n1 = ln(t, params["ln1_w"], params["ln1_b"])
    qkv = n1 @ params["w_qkv"].T                               # (B, S, 3C)
    qkv = qkv.reshape(B, S, 3, num_heads, hd).transpose(2, 0, 3, 1, 4)
    q, k, v = qkv[0], qkv[1], qkv[2]                           # (B, nh, S, hd)
    attn = jnp.einsum("bhid,bhjd->bhij", q, k) * scale
    attn = jax.nn.softmax(attn, axis=-1)
    o = jnp.einsum("bhij,bhjd->bhid", attn, v)
    o = o.transpose(0, 2, 1, 3).reshape(B, S, C)
    o = o @ params["w_proj"].T + params["b_proj"]
    t = t + params["gamma_1"] * o

    n2 = ln(t, params["ln2_w"], params["ln2_b"])
    h1 = jax.nn.gelu(n2 @ params["w_fc1"].T + params["b_fc1"], approximate=False)
    m = h1 @ params["w_fc2"].T + params["b_fc2"]
    t = t + params["gamma_2"] * m
    return t.transpose(0, 2, 1).reshape(B, C, H, W)


if __name__ == "__main__":
    key = jax.random.PRNGKey(0)
    B, C, H, W = 2, 32, 16, 16
    num_heads = 4
    hidden = 4 * C                      # mlp_ratio = 4.0

    keys = jax.random.split(key, 16)

    def rnd(k, shape, s=0.1):
        return jax.random.normal(k, shape, dtype=jnp.float32) * s

    x = jax.random.normal(keys[0], (B, C, H, W), dtype=jnp.float32)
    params = {
        "w_dw": rnd(keys[1], (C, 3, 3), 0.2),     # pos_embed depthwise weight
        "b_dw": rnd(keys[2], (C,), 0.1),          # pos_embed bias
        "ln1_w": 1.0 + rnd(keys[3], (C,), 0.1),
        "ln1_b": rnd(keys[4], (C,), 0.1),
        "w_qkv": rnd(keys[5], (3 * C, C), 0.1),   # torch (out, in), no bias
        "w_proj": rnd(keys[6], (C, C), 0.1),
        "b_proj": rnd(keys[7], (C,), 0.1),
        "gamma_1": 0.5 + rnd(keys[8], (C,), 0.1),
        "ln2_w": 1.0 + rnd(keys[9], (C,), 0.1),
        "ln2_b": rnd(keys[10], (C,), 0.1),
        "w_fc1": rnd(keys[11], (hidden, C), 0.1),
        "b_fc1": rnd(keys[12], (hidden,), 0.1),
        "w_fc2": rnd(keys[13], (C, hidden), 0.1),
        "b_fc2": rnd(keys[14], (C,), 0.1),
        "gamma_2": 0.5 + rnd(keys[15], (C,), 0.1),
    }

    out = sablock_pallas(x, params, num_heads)
    out = jax.block_until_ready(out)

    ref = sablock_reference(x, params, num_heads)
    assert out.shape == (B, C, H, W), out.shape
    err = float(jnp.max(jnp.abs(out - ref)))
    assert jnp.allclose(out, ref, atol=1e-4, rtol=1e-4), f"mismatch vs reference (max err {err})"

    print("KERNEL_OK")
</pallas_src>

<mosaic_0001>
module attributes {stable_mosaic.version = 11 : i64} {
  func.func @_pos_embed_kernel(%arg0: i32, %arg1: memref<1x32x18x18xf32, #tpu.memory_space<vmem>>, %arg2: memref<288xf32, #tpu.memory_space<smem>>, %arg3: memref<32xf32, #tpu.memory_space<smem>>, %arg4: memref<1x32x16x16xf32, #tpu.memory_space<vmem>>) attributes {dimension_semantics = [#tpu.dimension_semantics<parallel>], iteration_bounds = array<i64: 2>, scalar_prefetch = 0 : i64, scratch_operands = 0 : i64, tpu.core_type = #tpu.core_type<tc>, window_params = [{transform_indices = @transform_0, window_bounds = array<i64: 1, 32, 18, 18>}, {transform_indices = @transform_1, window_bounds = array<i64: 288>}, {transform_indices = @transform_2, window_bounds = array<i64: 32>}, {transform_indices = @transform_3, window_bounds = array<i64: 1, 32, 16, 16>}]} {
    %c0_i32 = arith.constant 0 : i32
    %c32_i32 = arith.constant 32 : i32
    %0 = arith.addi %c0_i32, %c32_i32 : i32
    %c1_i32 = arith.constant 1 : i32
    scf.for %arg5 = %c0_i32 to %0 step %c1_i32  : i32 {
      %c0 = arith.constant 0 : index
      %1 = arith.index_cast %arg5 : i32 to index
      %c0_1 = arith.constant 0 : index
      %c0_2 = arith.constant 0 : index
      %2 = vector.load %arg1[%c0, %1, %c0_1, %c0_2] : memref<1x32x18x18xf32, #tpu.memory_space<vmem>>, vector<1x1x18x18xf32>
      %3 = vector.shape_cast %2 : vector<1x1x18x18xf32> to vector<18x18xf32>
      %4 = vector.extract_strided_slice %3 {offsets = [1, 1], sizes = [16, 16], strides = [1, 1]} : vector<18x18xf32> to vector<16x16xf32>
      %5 = arith.index_cast %arg5 : i32 to index
      %6 = memref.load %arg3[%5] : memref<32xf32, #tpu.memory_space<smem>>
      %7 = vector.broadcast %6 : f32 to vector<16x16xf32>
      %8 = arith.addf %4, %7 : vector<16x16xf32>
      %9 = vector.extract_strided_slice %3 {offsets = [0, 0], sizes = [16, 16], strides = [1, 1]} : vector<18x18xf32> to vector<16x16xf32>
      %c9_i32 = arith.constant 9 : i32
      %10 = arith.muli %arg5, %c9_i32 : i32
      %c0_i32_3 = arith.constant 0 : i32
      %11 = arith.addi %10, %c0_i32_3 : i32
      %12 = arith.index_cast %11 : i32 to index
      %13 = memref.load %arg2[%12] : memref<288xf32, #tpu.memory_space<smem>>
      %14 = vector.broadcast %13 : f32 to vector<16x16xf32>
      %15 = arith.mulf %9, %14 : vector<16x16xf32>
      %16 = arith.addf %8, %15 : vector<16x16xf32>
      %17 = vector.extract_strided_slice %3 {offsets = [0, 1], sizes = [16, 16], strides = [1, 1]} : vector<18x18xf32> to vector<16x16xf32>
      %c9_i32_4 = arith.constant 9 : i32
      %18 = arith.muli %arg5, %c9_i32_4 : i32
      %c1_i32_5 = arith.constant 1 : i32
      %19 = arith.addi %18, %c1_i32_5 : i32
      %20 = arith.index_cast %19 : i32 to index
      %21 = memref.load %arg2[%20] : memref<288xf32, #tpu.memory_space<smem>>
      %22 = vector.broadcast %21 : f32 to vector<16x16xf32>
      %23 = arith.mulf %17, %22 : vector<16x16xf32>
      %24 = arith.addf %16, %23 : vector<16x16xf32>
      %25 = vector.extract_strided_slice %3 {offsets = [0, 2], sizes = [16, 16], strides = [1, 1]} : vector<18x18xf32> to vector<16x16xf32>
      %c9_i32_6 = arith.constant 9 : i32
      %26 = arith.muli %arg5, %c9_i32_6 : i32
      %c2_i32 = arith.constant 2 : i32
      %27 = arith.addi %26, %c2_i32 : i32
      %28 = arith.index_cast %27 : i32 to index
      %29 = memref.load %arg2[%28] : memref<288xf32, #tpu.memory_space<smem>>
      %30 = vector.broadcast %29 : f32 to vector<16x16xf32>
      %31 = arith.mulf %25, %30 : vector<16x16xf32>
      %32 = arith.addf %24, %31 : vector<16x16xf32>
      %33 = vector.extract_strided_slice %3 {offsets = [1, 0], sizes = [16, 16], strides = [1, 1]} : vector<18x18xf32> to vector<16x16xf32>
      %c9_i32_7 = arith.constant 9 : i32
      %34 = arith.muli %arg5, %c9_i32_7 : i32
      %c3_i32 = arith.constant 3 : i32
      %35 = arith.addi %34, %c3_i32 : i32
      %36 = arith.index_cast %35 : i32 to index
      %37 = memref.load %arg2[%36] : memref<288xf32, #tpu.memory_space<smem>>
      %38 = vector.broadcast %37 : f32 to vector<16x16xf32>
      %39 = arith.mulf %33, %38 : vector<16x16xf32>
      %40 = arith.addf %32, %39 : vector<16x16xf32>
      %41 = vector.extract_strided_slice %3 {offsets = [1, 1], sizes = [16, 16], strides = [1, 1]} : vector<18x18xf32> to vector<16x16xf32>
      %c9_i32_8 = arith.constant 9 : i32
      %42 = arith.muli %arg5, %c9_i32_8 : i32
      %c4_i32 = arith.constant 4 : i32
      %43 = arith.addi %42, %c4_i32 : i32
      %44 = arith.index_cast %43 : i32 to index
      %45 = memref.load %arg2[%44] : memref<288xf32, #tpu.memory_space<smem>>
      %46 = vector.broadcast %45 : f32 to vector<16x16xf32>
      %47 = arith.mulf %41, %46 : vector<16x16xf32>
      %48 = arith.addf %40, %47 : vector<16x16xf32>
      %49 = vector.extract_strided_slice %3 {offsets = [1, 2], sizes = [16, 16], strides = [1, 1]} : vector<18x18xf32> to vector<16x16xf32>
      %c9_i32_9 = arith.constant 9 : i32
      %50 = arith.muli %arg5, %c9_i32_9 : i32
      %c5_i32 = arith.constant 5 : i32
      %51 = arith.addi %50, %c5_i32 : i32
      %52 = arith.index_cast %51 : i32 to index
      %53 = memref.load %arg2[%52] : memref<288xf32, #tpu.memory_space<smem>>
      %54 = vector.broadcast %53 : f32 to vector<16x16xf32>
      %55 = arith.mulf %49, %54 : vector<16x16xf32>
      %56 = arith.addf %48, %55 : vector<16x16xf32>
      %57 = vector.extract_strided_slice %3 {offsets = [2, 0], sizes = [16, 16], strides = [1, 1]} : vector<18x18xf32> to vector<16x16xf32>
      %c9_i32_10 = arith.constant 9 : i32
      %58 = arith.muli %arg5, %c9_i32_10 : i32
      %c6_i32 = arith.constant 6 : i32
      %59 = arith.addi %58, %c6_i32 : i32
      %60 = arith.index_cast %59 : i32 to index
      %61 = memref.load %arg2[%60] : memref<288xf32, #tpu.memory_space<smem>>
      %62 = vector.broadcast %61 : f32 to vector<16x16xf32>
      %63 = arith.mulf %57, %62 : vector<16x16xf32>
      %64 = arith.addf %56, %63 : vector<16x16xf32>
      %65 = vector.extract_strided_slice %3 {offsets = [2, 1], sizes = [16, 16], strides = [1, 1]} : vector<18x18xf32> to vector<16x16xf32>
      %c9_i32_11 = arith.constant 9 : i32
      %66 = arith.muli %arg5, %c9_i32_11 : i32
      %c7_i32 = arith.constant 7 : i32
      %67 = arith.addi %66, %c7_i32 : i32
      %68 = arith.index_cast %67 : i32 to index
      %69 = memref.load %arg2[%68] : memref<288xf32, #tpu.memory_space<smem>>
      %70 = vector.broadcast %69 : f32 to vector<16x16xf32>
      %71 = arith.mulf %65, %70 : vector<16x16xf32>
      %72 = arith.addf %64, %71 : vector<16x16xf32>
      %73 = vector.extract_strided_slice %3 {offsets = [2, 2], sizes = [16, 16], strides = [1, 1]} : vector<18x18xf32> to vector<16x16xf32>
      %c9_i32_12 = arith.constant 9 : i32
      %74 = arith.muli %arg5, %c9_i32_12 : i32
      %c8_i32 = arith.constant 8 : i32
      %75 = arith.addi %74, %c8_i32 : i32
      %76 = arith.index_cast %75 : i32 to index
      %77 = memref.load %arg2[%76] : memref<288xf32, #tpu.memory_space<smem>>
      %78 = vector.broadcast %77 : f32 to vector<16x16xf32>
      %79 = arith.mulf %73, %78 : vector<16x16xf32>
      %80 = arith.addf %72, %79 : vector<16x16xf32>
      %c0_13 = arith.constant 0 : index
      %81 = arith.index_cast %arg5 : i32 to index
      %c0_14 = arith.constant 0 : index
      %c0_15 = arith.constant 0 : index
      %82 = vector.load %arg4[%c0_13, %81, %c0_14, %c0_15] : memref<1x32x16x16xf32, #tpu.memory_space<vmem>>, vector<1x1x16x16xf32>
      %83 = vector.shape_cast %82 : vector<1x1x16x16xf32> to vector<16x16xf32>
      %84 = vector.shape_cast %80 : vector<16x16xf32> to vector<1x1x16x16xf32>
      tpu.vector_store %arg4[%c0_13, %81, %c0_14, %c0_15], %84 {strides = array<i32>} : memref<1x32x16x16xf32, #tpu.memory_space<vmem>>, vector<1x1x16x16xf32>,
    }
    %c32_i32_0 = arith.constant 32 : i32
    return
  }
  func.func @transform_0(%arg0: i32) -> (i32, i32, i32, i32) {
    %c0_i32 = arith.constant 0 : i32
    %c0_i32_0 = arith.constant 0 : i32
    %c0_i32_1 = arith.constant 0 : i32
    %c0_i32_2 = arith.constant 0 : i32
    return %arg0, %c0_i32, %c0_i32_0, %c0_i32_1 : i32, i32, i32, i32
  }
  func.func @transform_1(%arg0: i32) -> i32 {
    %c0_i32 = arith.constant 0 : i32
    %c0_i32_0 = arith.constant 0 : i32
    return %c0_i32 : i32
  }
  func.func @transform_2(%arg0: i32) -> i32 {
    %c0_i32 = arith.constant 0 : i32
    %c0_i32_0 = arith.constant 0 : i32
    return %c0_i32 : i32
  }
  func.func @transform_3(%arg0: i32) -> (i32, i32, i32, i32) {
    %c0_i32 = arith.constant 0 : i32
    %c0_i32_0 = arith.constant 0 : i32
    %c0_i32_1 = arith.constant 0 : i32
    %c0_i32_2 = arith.constant 0 : i32
    return %arg0, %c0_i32, %c0_i32_0, %c0_i32_1 : i32, i32, i32, i32
  }
}

</mosaic_0001>

<llo_original>
// kernel: tpu_custom_call.1
$region0: #{tpu_custom_call.1}
  #allocation0 [shape = 'u32[]', space=smem, size = 0x4, offset = 0x4, fixed_abs, tag = 'smem constant byte address 0x4 - core index']
  #allocation1 [shape = 'u32[144,128]{1,0:T(1,128)}', space=vmem, size = 0x12000, scoped, tag = 'internal scratch']
  %s0 = inlined_call_operand.vmem [shape: f32[2,32,18,18], index: 0, kind: input, shape index: {}]
  %s1 = inlined_call_operand.vmem [shape: f32[288], index: 1, kind: input, shape index: {}]
  %s2 = inlined_call_operand.vmem [shape: f32[32], index: 2, kind: input, shape index: {}]
  %s3 = inlined_call_operand.vmem [shape: f32[2,32,16,16], index: 3, kind: output, shape index: {}]
  %s4 = sld [smem:[#allocation0]]
  $region60: #{tpu_custom_call.1} parent=0
    _
  %s6 = ssub.s32 1, %s4
  %s7 = scalar_select 0, %s6, %s4
  $region1: #{tpu_custom_call.1} parent=0
    #allocation2 [shape = 'u8[1536]{0}', space=smem, size = 0x600, scoped, tag = 'input window, operand 1, single buffered']
    #allocation3 [shape = 's32[2]{0}', space=sflag, size = 0x8, scoped, tag = 'scoped memory for tpu_custom_call.1']
    #allocation4 [shape = 'u8[512]{0}', space=smem, size = 0x200, scoped, tag = 'input window, operand 2, single buffered']
    #allocation5 [shape = 's32[1]{0}', space=sflag, size = 0x4, scoped, tag = 'scoped memory for tpu_custom_call.1']
    %8 = vsyncpa [#allocation3], 0
    %9 = vsyncpa [#allocation5], 0
    loop: start=0, step=1, limit=4
    $region2: #{tpu_custom_call.1} parent=1 // loop_pre_header
      _
    $region3: #{tpu_custom_call.1} parent=1 // loop_header
      %s11 = sphi 0, %s15
      %p12 = scmp.ge.s32.totalorder %s11, 4
      %s21 = sphi 0, %s23
      %s24 = sphi 0, %s21
      %s25 = sphi 0, %s24
      %s41 = sphi 0, %s25
      %s45 = sphi 0, %s45
      %s47 = sphi 0, %s45
      %s48 = sphi 0, %s47
      %s62 = sphi 0, %s48
      %s66 = sphi 0, %s66
      %s68 = sphi 0, %s66
      %s69 = sphi 0, %s68
      %s83 = sphi 0, %s69
      %s89 = sphi 0, %s91
      %s92 = sphi 0, %s89
      %s93 = sphi 0, %s92
      %s109 = sphi 0, %s93
    $region4: #{tpu_custom_call.1} parent=1 // loop_header_branch
      %14 = sbr.rel (%p12) target = $region8
    $region5: #{tpu_custom_call.1} parent=1 // loop_body
      %s16 = ssub.s32 %s11, 1
      %s17 = ssub.s32 %s11, 2
      %s18 = sadd.s32 %s11, 1
      %s19 = ssub.s32 %s11, %s18
      %p20 = scmp.eq.s32.totalorder %s19, 0
      %s22 = sadd.s32 %s21, 1
      %s23 = scalar_select %p20, %s21, %s22
      %p26 = pneg %p20
      %p27 = scmp.eq.s32.totalorder %s11, 1
      %p28 = por %p26, %p27
      %p29 = scmp.ne.s32.totalorder %s21, %s24
      %p30 = scmp.eq.s32.totalorder %s11, 0
      %p31 = por %p29, %p30
      %p32 = scmp.ne.s32.totalorder %s21, %s24
      %p33 = scmp.eq.s32.totalorder %s16, 1
      %p34 = por %p32, %p33
      %p35 = scmp.ne.s32.totalorder %s24, %s25
      %p36 = scmp.eq.s32.totalorder %s16, 0
      %p37 = por %p35, %p36
      %p38 = scmp.ne.s32.totalorder %s24, %s25
      %p39 = scmp.eq.s32.totalorder %s17, 1
      %p40 = por %p38, %p39
      %p42 = scmp.ne.s32.totalorder %s25, %s41
      %p43 = scmp.eq.s32.totalorder %s17, 0
      %p44 = por %p42, %p43
      %s46 = sadd.s32 %s45, 1
      %p49 = scmp.eq.s32.totalorder %s11, 1
      %p50 = scmp.ne.s32.totalorder %s45, %s47
      %p51 = scmp.eq.s32.totalorder %s11, 0
      %p52 = por %p50, %p51
      %p53 = scmp.ne.s32.totalorder %s45, %s47
      %p54 = scmp.eq.s32.totalorder %s16, 1
      %p55 = por %p53, %p54
      %p56 = scmp.ne.s32.totalorder %s47, %s48
      %p57 = scmp.eq.s32.totalorder %s16, 0
      %p58 = por %p56, %p57
      %p59 = scmp.ne.s32.totalorder %s47, %s48
      %p60 = scmp.eq.s32.totalorder %s17, 1
      %p61 = por %p59, %p60
      %p63 = scmp.ne.s32.totalorder %s48, %s62
      %p64 = scmp.eq.s32.totalorder %s17, 0
      %p65 = por %p63, %p64
      %s67 = sadd.s32 %s66, 1
      %p70 = scmp.eq.s32.totalorder %s11, 1
      %p71 = scmp.ne.s32.totalorder %s66, %s68
      %p72 = scmp.eq.s32.totalorder %s11, 0
      %p73 = por %p71, %p72
      %p74 = scmp.ne.s32.totalorder %s66, %s68
      %p75 = scmp.eq.s32.totalorder %s16, 1
      %p76 = por %p74, %p75
      %p77 = scmp.ne.s32.totalorder %s68, %s69
      %p78 = scmp.eq.s32.totalorder %s16, 0
      %p79 = por %p77, %p78
      %p80 = scmp.ne.s32.totalorder %s68, %s69
      %p81 = scmp.eq.s32.totalorder %s17, 1
      %p82 = por %p80, %p81
      %p84 = scmp.ne.s32.totalorder %s69, %s83
      %p85 = scmp.eq.s32.totalorder %s17, 0
      %p86 = por %p84, %p85
      %s87 = ssub.s32 %s11, %s18
      %p88 = scmp.eq.s32.totalorder %s87, 0
      %s90 = sadd.s32 %s89, 1
      %s91 = scalar_select %p88, %s89, %s90
      %p94 = pneg %p88
      %p95 = scmp.eq.s32.totalorder %s11, 1
      %p96 = por %p94, %p95
      %p97 = scmp.ne.s32.totalorder %s89, %s92
      %p98 = scmp.eq.s32.totalorder %s11, 0
      %p99 = por %p97, %p98
      %p100 = scmp.ne.s32.totalorder %s89, %s92
      %p101 = scmp.eq.s32.totalorder %s16, 1
      %p102 = por %p100, %p101
      %p103 = scmp.ne.s32.totalorder %s92, %s93
      %p104 = scmp.eq.s32.totalorder %s16, 0
      %p105 = por %p103, %p104
      %p106 = scmp.ne.s32.totalorder %s92, %s93
      %p107 = scmp.eq.s32.totalorder %s17, 1
      %p108 = por %p106, %p107
      %p110 = scmp.ne.s32.totalorder %s93, %s109
      %p111 = scmp.eq.s32.totalorder %s17, 0
      %p112 = por %p110, %p111
      %p113 = scmp.le.s32.totalorder 1, %s11
      %p114 = scmp.lt.s32.totalorder %s11, 3
      %p115 = pnand %p113, %p114
      %p116 = pneg %p115
      // Predicated region
      $region9: #{tpu_custom_call.1} parent=5 // pred_check
        _
      $region10: #{tpu_custom_call.1} parent=5 // pred_check_branch
        %118 = sbr.rel (%p115) target = $region12
      $region11: #{tpu_custom_call.1} parent=5 // pred_region
        %s119 = ssub.s32 %s11, 1
        // Predicated region
        $region13: #{tpu_custom_call.1} parent=11 // pred_check
          %p120 = pneg %p58
        $region14: #{tpu_custom_call.1} parent=11 // pred_check_branch
          %122 = sbr.rel (%p120) target = $region16
        $region15: #{tpu_custom_call.1} parent=11 // pred_region
          %s124 = ssub.s32 48, 48
          %125 = vsyncadd [#allocation3], %s124
          %s127 = sshll.u32 %s1, 4
          %s128 = int_to_ptr.vmem [resolvable:$true] %s127
          %130 = dma.vmem_to_smem %s128, 48, [#allocation2], [#allocation3]
        $region16: #{tpu_custom_call.1} parent=11 // pred_fallthru
          _
        // Predicated region
        $region17: #{tpu_custom_call.1} parent=11 // pred_check
          %p131 = pneg %p79
        $region18: #{tpu_custom_call.1} parent=11 // pred_check_branch
          %133 = sbr.rel (%p131) target = $region20
        $region19: #{tpu_custom_call.1} parent=11 // pred_region
          %s135 = ssub.s32 16, 16
          %136 = vsyncadd [#allocation5], %s135
          %s138 = sshll.u32 %s2, 4
          %s139 = int_to_ptr.vmem [resolvable:$true] %s138
          %141 = dma.vmem_to_smem %s139, 16, [#allocation4], [#allocation5]
        $region20: #{tpu_custom_call.1} parent=11 // pred_fallthru
          _
      $region12: #{tpu_custom_call.1} parent=5 // pred_fallthru
        _
      %p142 = scmp.lt.s32.totalorder %s11, 2
      // Predicated region
      $region21: #{tpu_custom_call.1} parent=5 // pred_check
        %p143 = pneg %p142
      $region22: #{tpu_custom_call.1} parent=5 // pred_check_branch
        %145 = sbr.rel (%p143) target = $region24
      $region23: #{tpu_custom_call.1} parent=5 // pred_region
        // Predicated region
        $region25: #{tpu_custom_call.1} parent=23 // pred_check
          %p146 = pneg %p31
        $region26: #{tpu_custom_call.1} parent=23 // pred_check_branch
          %148 = sbr.rel (%p146) target = $region28
        $region27: #{tpu_custom_call.1} parent=23 // pred_region
          %p149 = scmp.lt.s32.totalorder %s11, 1
          %s150 = scalar_select %p149, %s11, 1
          %s151 = smul.addr %s150, 96
          %s152 = smul.addr %s151, 8
          %s153 = scalar_lea.vmem %s0, %s152
        $region28: #{tpu_custom_call.1} parent=23 // pred_fallthru
          _
      $region24: #{tpu_custom_call.1} parent=5 // pred_fallthru
        _
      %p154 = scmp.le.s32.totalorder 1, %s11
      %p155 = scmp.lt.s32.totalorder %s11, 3
      %p156 = pnand %p154, %p155
      %p157 = pneg %p156
      // Predicated region
      $region29: #{tpu_custom_call.1} parent=5 // pred_check
        _
      $region30: #{tpu_custom_call.1} parent=5 // pred_check_branch
        %159 = sbr.rel (%p156) target = $region32
      $region31: #{tpu_custom_call.1} parent=5 // pred_region
        %s160 = ssub.s32 %s11, 1
        // Predicated region
        $region33: #{tpu_custom_call.1} parent=31 // pred_check
          %p161 = pneg %p58
        $region34: #{tpu_custom_call.1} parent=31 // pred_check_branch
          %163 = sbr.rel (%p161) target = $region36
        $region35: #{tpu_custom_call.1} parent=31 // pred_region
          %164 = dma.done [#allocation3], 48
        $region36: #{tpu_custom_call.1} parent=31 // pred_fallthru
          _
        // Predicated region
        $region37: #{tpu_custom_call.1} parent=31 // pred_check
          %p165 = pneg %p79
        $region38: #{tpu_custom_call.1} parent=31 // pred_check_branch
          %167 = sbr.rel (%p165) target = $region40
        $region39: #{tpu_custom_call.1} parent=31 // pred_region
          %168 = dma.done [#allocation5], 16
        $region40: #{tpu_custom_call.1} parent=31 // pred_fallthru
          _
        %169 = sfence
        %p170 = scmp.lt.s32.totalorder %s16, 1
        %s171 = scalar_select %p170, %s16, 1
        %s172 = smul.addr %s171, 96
        %s173 = smul.addr %s172, 8
        %s174 = scalar_lea.vmem %s0, %s173
        %p175 = pneg %p37
        %p176 = pneg %p34
        %p177 = pneg %p58
        %p178 = pneg %p55
        %p179 = pneg %p79
        %p180 = pneg %p76
        %p181 = pneg %p105
        %p182 = pneg %p102
        %p183 = scmp.lt.s32.totalorder %s16, 1
        %s184 = scalar_select %p183, %s16, 1
        %s185 = smul.addr %s184, 64
        %s186 = smul.addr %s185, 8
        %s187 = scalar_lea.vmem %s3, %s186
        %p188 = scmp.lt.s32.totalorder %s16, 1
        %s189 = scalar_select %p188, %s16, 1
        %s190 = smul.addr %s189, 96
        %s191 = smul.addr %s190, 8
        %s192 = scalar_lea.vmem %s0, %s191
        %p193 = scmp.lt.s32.totalorder %s16, 1
        %s194 = scalar_select %p193, %s16, 1
        %s195 = smul.addr %s194, 64
        %s196 = smul.addr %s195, 8
        %s197 = scalar_lea.vmem %s3, %s196
        loop: start=0, step=1, limit=32
        $region41: #{tpu_custom_call.1} parent=31 // loop_pre_header
          _
        $region42: #{tpu_custom_call.1} parent=31 // loop_header
          %s199 = sphi 0, %s203
          %p200 = scmp.ge.s32.totalorder %s199, 32
        $region43: #{tpu_custom_call.1} parent=31 // loop_header_branch
          %202 = sbr.rel (%p200) target = $region47
        $region44: #{tpu_custom_call.1} parent=31 // loop_body
          %s204 = smul.u32 %s199, 24
          %s205 = scalar_lea.vmem %s192, %s204
          %v206 = vld [vmem:[%s205] sm:$0xff]
          %v207 = vld [vmem:[%s205 + $0x8] sm:$0xff]
          %v208 = vld [vmem:[%s205 + $0x10] sm:$0x3]
          %s209 = sld [smem:[#allocation4 + %s199]]
          %v210 = vstv %s209
          %v211 = vadd.f32 %v206, %v210
          %v212 = vadd.f32 %v207, %v210
          %v213 = vadd.f32 %v208, %v210
          %s214 = smul.u32 %s199, 9
          %s215 = sld [smem:[#allocation2 + %s214]]
          %v216 = vstv %s215
          %v217 = vmul.f32 %v206, %v216
          %v218 = vmul.f32 %v207, %v216
          %vm221 = vcmask 1040384
          %v222 = vrot.slane %v217, 7
          %v223 = vrot.slane %v218, 7
          %v224 = vsel %vm221, %v222, %v223
          %225 = vrot.lane.b32.xlu0 %v222, 1
          %v226 = vpop.permute.xlu0 %225
          %227 = vrot.lane.b32.xlu0 %v224, 1
          %v228 = vpop.permute.xlu0 %227
          %229 = vrot.lane.b32.xlu0 %v223, 1
          %v230 = vpop.permute.xlu0 %229
          %v234 = vadd.f32 %v211, %v226
          %v235 = vadd.f32 %v212, %v228
          %v236 = vadd.f32 %v213, %v230
          %s237 = sadd.s32 %s214, 1
          %s238 = sld [smem:[#allocation2 + %s237]]
          %v239 = vstv %s238
          %v240 = vmul.f32 %v206, %v239
          %v241 = vmul.f32 %v207, %v239
          %v244 = vrot.slane %v240, 7
          %v245 = vrot.slane %v241, 7
          %v246 = vsel %vm221, %v244, %v245
          %v250 = vadd.f32 %v234, %v244
          %v251 = vadd.f32 %v235, %v246
          %v252 = vadd.f32 %v236, %v245
          %s253 = sadd.s32 %s214, 2
          %s254 = sld [smem:[#allocation2 + %s253]]
          %v255 = vstv %s254
          %v256 = vmul.f32 %v206, %v255
          %v257 = vmul.f32 %v207, %v255
          %v260 = vrot.slane %v256, 7
          %v261 = vrot.slane %v257, 7
          %v262 = vsel %vm221, %v260, %v261
          %263 = vrot.lane.b32.xlu0 %v260, 127
          %v264 = vpop.permute.xlu0 %263
          %265 = vrot.lane.b32.xlu0 %v262, 127
          %v266 = vpop.permute.xlu0 %265
          %267 = vrot.lane.b32.xlu0 %v261, 127
          %v268 = vpop.permute.xlu0 %267
          %v272 = vadd.f32 %v250, %v264
          %v273 = vadd.f32 %v251, %v266
          %v274 = vadd.f32 %v252, %v268
          %s275 = sadd.s32 %s214, 3
          %s276 = sld [smem:[#allocation2 + %s275]]
          %v277 = vstv %s276
          %v278 = vmul.f32 %v206, %v277
          %v279 = vmul.f32 %v207, %v277
          %v280 = vmul.f32 %v208, %v277
          %284 = vrot.lane.b32.xlu0 %v278, 1
          %v285 = vpop.permute.xlu0 %284
          %286 = vrot.lane.b32.xlu0 %v279, 1
          %v287 = vpop.permute.xlu0 %286
          %288 = vrot.lane.b32.xlu0 %v280, 1
          %v289 = vpop.permute.xlu0 %288
          %v293 = vadd.f32 %v272, %v285
          %v294 = vadd.f32 %v273, %v287
          %v295 = vadd.f32 %v274, %v289
          %s296 = sadd.s32 %s214, 4
          %s297 = sld [smem:[#allocation2 + %s296]]
          %v298 = vstv %s297
          %v299 = vmul.f32 %v206, %v298
          %v300 = vmul.f32 %v207, %v298
          %v301 = vmul.f32 %v208, %v298
          %v302 = vadd.f32 %v293, %v299
          %v303 = vadd.f32 %v294, %v300
          %v304 = vadd.f32 %v295, %v301
          %s305 = sadd.s32 %s214, 5
          %s306 = sld [smem:[#allocation2 + %s305]]
          %v307 = vstv %s306
          %v308 = vmul.f32 %v206, %v307
          %v309 = vmul.f32 %v207, %v307
          %v310 = vmul.f32 %v208, %v307
          %314 = vrot.lane.b32.xlu0 %v308, 127
          %v315 = vpop.permute.xlu0 %314
          %316 = vrot.lane.b32.xlu0 %v309, 127
          %v317 = vpop.permute.xlu0 %316
          %318 = vrot.lane.b32.xlu0 %v310, 127
          %v319 = vpop.permute.xlu0 %318
          %v323 = vadd.f32 %v302, %v315
          %v324 = vadd.f32 %v303, %v317
          %v325 = vadd.f32 %v304, %v319
          %s326 = sadd.s32 %s214, 6
          %s327 = sld [smem:[#allocation2 + %s326]]
          %v328 = vstv %s327
          %v329 = vmul.f32 %v206, %v328
          %v330 = vmul.f32 %v207, %v328
          %v331 = vmul.f32 %v208, %v328
          %vm335 = vcmask 1046528
          %v336 = vrot.slane %v329, 1
          %v337 = vrot.slane %v330, 1
          %v338 = vsel %vm335, %v336, %v337
          %v339 = vrot.slane %v331, 1
          %v340 = vsel %vm335, %v337, %v339
          %341 = vrot.lane.b32.xlu0 %v338, 1
          %v342 = vpop.permute.xlu0 %341
          %343 = vrot.lane.b32.xlu0 %v340, 1
          %v344 = vpop.permute.xlu0 %343
          %345 = vrot.lane.b32.xlu0 %v339, 1
          %v346 = vpop.permute.xlu0 %345
          %v350 = vadd.f32 %v323, %v342
          %v351 = vadd.f32 %v324, %v344
          %v352 = vadd.f32 %v325, %v346
          %s353 = sadd.s32 %s214, 7
          %s354 = sld [smem:[#allocation2 + %s353]]
          %v355 = vstv %s354
          %v356 = vmul.f32 %v206, %v355
          %v357 = vmul.f32 %v207, %v355
          %v358 = vmul.f32 %v208, %v355
          %v362 = vrot.slane %v356, 1
          %v363 = vrot.slane %v357, 1
          %v364 = vsel %vm335, %v362, %v363
          %v365 = vrot.slane %v358, 1
          %v366 = vsel %vm335, %v363, %v365
          %v370 = vadd.f32 %v350, %v364
          %v371 = vadd.f32 %v351, %v366
          %v372 = vadd.f32 %v352, %v365
          %s373 = sadd.s32 %s214, 8
          %s374 = sld [smem:[#allocation2 + %s373]]
          %v375 = vstv %s374
          %v376 = vmul.f32 %v206, %v375
          %v377 = vmul.f32 %v207, %v375
          %v378 = vmul.f32 %v208, %v375
          %v382 = vrot.slane %v376, 1
          %v383 = vrot.slane %v377, 1
          %v384 = vsel %vm335, %v382, %v383
          %v385 = vrot.slane %v378, 1
          %v386 = vsel %vm335, %v383, %v385
          %387 = vrot.lane.b32.xlu0 %v384, 127
          %v388 = vpop.permute.xlu0 %387
          %389 = vrot.lane.b32.xlu0 %v386, 127
          %v390 = vpop.permute.xlu0 %389
          %391 = vrot.lane.b32.xlu0 %v385, 127
          %v392 = vpop.permute.xlu0 %391
          %v396 = vadd.f32 %v370, %v388
          %v397 = vadd.f32 %v371, %v390
          %v398 = vadd.f32 %v372, %v392
          %402 = vrot.lane.b32.xlu0 %v396, 127
          %v403 = vpop.permute.xlu0 %402
          %404 = vrot.lane.b32.xlu0 %v397, 127
          %v405 = vpop.permute.xlu0 %404
          %406 = vrot.lane.b32.xlu0 %v398, 127
          %v407 = vpop.permute.xlu0 %406
          %s411 = smul.u32 %s199, 16
          %s412 = scalar_lea.vmem %s197, %s411
          %vm413 = vcmask 130049
          %414 = vst.msk [vmem:[%s412 - $0x1] sm:$0xfe] %vm413, %v403
          %vm415 = vcmask 130048
          %416 = vst.msk [vmem:[%s412 + $0x7] sm:$0xff] %vm415, %v405
          %vm417 = vcmask 122880
          %418 = vst.msk [vmem:[%s412 + $0xf] sm:$0x1] %vm417, %v407
        $region45: #{tpu_custom_call.1} parent=31 // loop_footer
          %s203 = sadd.s32 1, %s199
        $region46: #{tpu_custom_call.1} parent=31 // loop_footer_branch
          %198 = sbr.rel target = $region42
        $region47: #{tpu_custom_call.1} parent=31 // loop_exit
          _
        %p419 = scmp.lt.s32.totalorder %s16, 1
        %s420 = scalar_select %p419, %s16, 1
        %s421 = smul.addr %s420, 64
        %s422 = smul.addr %s421, 8
        %s423 = scalar_lea.vmem %s3, %s422
        // Predicated region
        $region48: #{tpu_custom_call.1} parent=31 // pred_check
          %p424 = pneg %p102
        $region49: #{tpu_custom_call.1} parent=31 // pred_check_branch
          %426 = sbr.rel (%p424) target = $region51
        $region50: #{tpu_custom_call.1} parent=31 // pred_region
          _
        $region51: #{tpu_custom_call.1} parent=31 // pred_fallthru
          _
      $region32: #{tpu_custom_call.1} parent=5 // pred_fallthru
        _
      %p427 = scmp.le.s32.totalorder 2, %s11
      // Predicated region
      $region52: #{tpu_custom_call.1} parent=5 // pred_check
        %p428 = pneg %p427
      $region53: #{tpu_custom_call.1} parent=5 // pred_check_branch
        %430 = sbr.rel (%p428) target = $region55
      $region54: #{tpu_custom_call.1} parent=5 // pred_region
        %s431 = ssub.s32 %s11, 2
        // Predicated region
        $region56: #{tpu_custom_call.1} parent=54 // pred_check
          %p432 = pneg %p108
        $region57: #{tpu_custom_call.1} parent=54 // pred_check_branch
          %434 = sbr.rel (%p432) target = $region59
        $region58: #{tpu_custom_call.1} parent=54 // pred_region
          %p435 = scmp.lt.s32.totalorder %s17, 1
          %s436 = scalar_select %p435, %s17, 1
          %s437 = smul.addr %s436, 64
          %s438 = smul.addr %s437, 8
          %s439 = scalar_lea.vmem %s3, %s438
        $region59: #{tpu_custom_call.1} parent=54 // pred_fallthru
          _
      $region55: #{tpu_custom_call.1} parent=5 // pred_fallthru
        _
    $region6: #{tpu_custom_call.1} parent=1 // loop_footer
      %s15 = sadd.s32 1, %s11
    $region7: #{tpu_custom_call.1} parent=1 // loop_footer_branch
      %10 = sbr.rel target = $region3
    $region8: #{tpu_custom_call.1} parent=1 // loop_exit
      _
    %440 = vsyncpa [#allocation3], 1
    %s441 = scalar_lea.sflag [#allocation3], 1
    %442 = vsyncpa %s441, 1
    %443 = vsyncpa [#allocation5], 1

</llo_original>
